<compile_context>
chip_gen: v7x
topology: tpu7x:2x2x1
jax: 0.10.0
libtpu: 0.0.40
codegen_flags: <defaults>
</compile_context>

<pallas_src>
import jax
import jax.numpy as jnp
from jax.experimental import pallas as pl
from jax.experimental.pallas import tpu as pltpu


# ----------------------------- config ---------------------------------------
LANE = 128          # TPU lane width; hidden widths are padded to this
DIN = 32            # cfg.din
N_LAYERS = 2        # cfg.n_layers -> true dims: 32 -> 16 -> 8 -> 1
N_NODES = 200       # demo row count (not a tile multiple, exercises raggedness)
MAX_TILE_N = 512    # rows per grid step for large N (85%+ of HBM roofline)


# ----------------------------- kernel ----------------------------------------
def _make_mlp_kernel(din: int, n_layers: int):
    """Fused MLP over one row tile.  All weight slices are compile-time static."""

    def kernel(x_ref, w_ref, b_ref, o_ref):
        h = x_ref[...]                                   # (TILE_N, din) f32
        off, k = 0, din
        for layer in range(n_layers):
            w = w_ref[off:off + k, :]                    # (k, LANE) bf16, 0-padded
            b = b_ref[layer:layer + 1, :].astype(jnp.float32)   # (1, LANE)
            h = jnp.dot(h.astype(jnp.bfloat16), w,
                        preferred_element_type=jnp.float32) + b
            h = jnp.maximum(h, 0.0)                      # ReLU; Dropout = identity
            off, k = off + k, LANE                       # hidden acts are 128 wide

        # Final Linear(d_last -> 1), transposed orientation:
        #   transpose h FIRST (XLU slot) so the MXU output is a full 128-lane
        #   row, then (8, LANE) @ (LANE, TILE_N) -> take row 0 -> (1, TILE_N).
        # The LHS is the final weight row broadcast over 8 sublanes (avoids an
        # M=1 matmul); lane LANE-1 of that row holds b_last, which multiplies
        # the constant-one column planted by the last hidden layer's bias pad.
        ht = h.T.astype(jnp.bfloat16)                    # (LANE, TILE_N)
        w_last = jnp.broadcast_to(b_ref[n_layers:n_layers + 1, :], (8, LANE))
        y = jnp.dot(w_last, ht, preferred_element_type=jnp.float32)  # (8, TILE_N)
        o_ref[...] = y[0:1, :]                           # lane-dense (1, TILE_N)

    return kernel


# ----------------------------- wrapper ----------------------------------------
def _pick_tile(n: int) -> int:
    """Lane-multiple row tile; prefer >=2 grid steps so v7x's two TCs both work."""
    lane_blocks = pl.cdiv(n, LANE)
    if lane_blocks <= 1:
        return LANE
    per_tile = min(MAX_TILE_N // LANE, pl.cdiv(lane_blocks, 2))
    return per_tile * LANE


def graph_classification_head(x, params):
    """x: (N, DIN) float32.  Returns (N, 1) float32."""
    n, din = x.shape
    w_packed = params["w_packed"]            # (din + (N_LAYERS-1)*LANE, LANE) bf16
    b_packed = params["b_packed"]            # (8, LANE) bf16

    tile_n = _pick_tile(n)
    n_tiles = pl.cdiv(n, tile_n)
    n_pad = n_tiles * tile_n                 # output width only; x is NOT padded

    kernel = _make_mlp_kernel(din, N_LAYERS)

    out = pl.pallas_call(
        kernel,
        out_shape=jax.ShapeDtypeStruct((1, n_pad), jnp.float32),
        grid_spec=pl.GridSpec(
            grid=(n_tiles,),
            in_specs=[
                # Row tile of node features; last dim equals full array dim (32).
                # Ragged last block: OOB rows are unspecified and discarded later.
                pl.BlockSpec((tile_n, din), lambda i: (i, 0)),
                # Invariant operands: constant index_map -> resident in VMEM.
                pl.BlockSpec(w_packed.shape, lambda i: (0, 0)),
                pl.BlockSpec(b_packed.shape, lambda i: (0, 0)),
            ],
            out_specs=pl.BlockSpec((1, tile_n), lambda i: (0, i)),
        ),
        compiler_params=pltpu.CompilerParams(
            dimension_semantics=("parallel",),   # shard row tiles across TCs
        ),
    )(x, w_packed, b_packed)

    # Single-row slice (drops tile padding) + reshape to (N, 1).
    return out[0, :n, None]


# ----------------------------- params ----------------------------------------
def init_params(key, din=DIN, n_layers=N_LAYERS):
    """Deterministic synthetic parameters with the shapes the module implies."""
    dims, d = [], din
    for _ in range(n_layers):
        dims.append((d, d // 2))
        d //= 2
    dims.append((d, 1))

    keys = jax.random.split(key, len(dims))
    ws, bs = [], []
    for (di, do), k in zip(dims, keys):
        kw, kb = jax.random.split(k)
        scale = 1.0 / jnp.sqrt(jnp.float32(di))
        # Stored as (din, dout) == W^T so the kernel computes x @ W + b.
        ws.append(jax.random.uniform(kw, (di, do), jnp.float32,
                                     minval=-1.0, maxval=1.0) * scale)
        bs.append(jax.random.uniform(kb, (1, do), jnp.float32,
                                     minval=-1.0, maxval=1.0) * scale)

    # -- packed weight slab (bf16): w1 is (din, LANE); deeper hidden layers are
    #    zero-extended to (LANE, LANE) so every contraction keeps K = 128. --
    blocks = [jnp.pad(ws[0], ((0, 0), (0, LANE - ws[0].shape[1])))]
    for w in ws[1:-1]:
        blk = jnp.zeros((LANE, LANE), jnp.float32)
        blk = blk.at[:w.shape[0], :w.shape[1]].set(w)
        blocks.append(blk)
    w_packed = jnp.concatenate(blocks, axis=0).astype(jnp.bfloat16)

    # -- bias / final-layer slab (8, LANE) bf16:
    #    row l (< n_layers)      : bias of hidden layer l, zero padded
    #    row n_layers-1, lane -1 : 1.0  -> constant-one column after ReLU
    #    row n_layers            : final weight row; lane -1 holds the final bias
    b_slab = jnp.zeros((8, LANE), jnp.float32)
    for l in range(n_layers):
        b_slab = b_slab.at[l, :bs[l].shape[1]].set(bs[l][0])
    b_slab = b_slab.at[n_layers - 1, LANE - 1].set(1.0)
    b_slab = b_slab.at[n_layers, :ws[-1].shape[0]].set(ws[-1][:, 0])
    b_slab = b_slab.at[n_layers, LANE - 1].set(bs[-1][0, 0])
    b_packed = b_slab.astype(jnp.bfloat16)

    # f32 copies of the bf16-rounded params for the reference check.
    ws_q = [w.astype(jnp.bfloat16).astype(jnp.float32) for w in ws]
    bs_q = [b.astype(jnp.bfloat16).astype(jnp.float32) for b in bs]
    return {"w_packed": w_packed, "b_packed": b_packed, "ws": ws_q, "bs": bs_q}


def reference_forward(x, params):
    """Plain-JAX f32 reference on the bf16-rounded params (eval-mode module)."""
    h = x
    ws, bs = params["ws"], params["bs"]
    for i in range(len(ws) - 1):
        h = jnp.maximum(h @ ws[i] + bs[i], 0.0)
    return h @ ws[-1] + bs[-1]


if __name__ == "__main__":
    key = jax.random.PRNGKey(0)
    kx, kp = jax.random.split(key)

    x = jax.random.normal(kx, (N_NODES, DIN), dtype=jnp.float32)
    params = init_params(kp)

    out = graph_classification_head(x, params)
    out = jax.block_until_ready(out)

    ref = reference_forward(x, params)
    assert out.shape == (N_NODES, 1), out.shape
    # bf16 MXU operands with f32 accumulation: loosened tolerance vs f32 ref.
    assert jnp.allclose(out, ref, atol=3e-2, rtol=3e-2), (
        float(jnp.max(jnp.abs(out - ref)))
    )
    print("KERNEL_OK")
</pallas_src>

<mosaic_0001>
module attributes {stable_mosaic.version = 11 : i64} {
  func.func @kernel(%arg0: i32, %arg1: memref<128x32xf32, #tpu.memory_space<vmem>>, %arg2: memref<160x128xbf16, #tpu.memory_space<vmem>>, %arg3: memref<8x128xbf16, #tpu.memory_space<vmem>>, %arg4: memref<1x128xf32, #tpu.memory_space<vmem>>) attributes {dimension_semantics = [#tpu.dimension_semantics<parallel>], iteration_bounds = array<i64: 2>, scalar_prefetch = 0 : i64, scratch_operands = 0 : i64, tpu.core_type = #tpu.core_type<tc>, window_params = [{transform_indices = @transform_0, window_bounds = array<i64: 128, 32>}, {pipeline_mode = #tpu.pipeline_mode<synchronous>, transform_indices = @transform_1, window_bounds = array<i64: 160, 128>}, {pipeline_mode = #tpu.pipeline_mode<synchronous>, transform_indices = @transform_2, window_bounds = array<i64: 8, 128>}, {transform_indices = @transform_3, window_bounds = array<i64: 1, 128>}]} {
    %c0 = arith.constant 0 : index
    %c0_0 = arith.constant 0 : index
    %0 = vector.load %arg1[%c0, %c0_0] : memref<128x32xf32, #tpu.memory_space<vmem>>, vector<128x32xf32>
    %c0_1 = arith.constant 0 : index
    %c0_2 = arith.constant 0 : index
    %1 = vector.load %arg2[%c0_1, %c0_2] : memref<160x128xbf16, #tpu.memory_space<vmem>>, vector<32x128xbf16>
    %c0_3 = arith.constant 0 : index
    %c0_4 = arith.constant 0 : index
    %2 = vector.load %arg3[%c0_3, %c0_4] : memref<8x128xbf16, #tpu.memory_space<vmem>>, vector<1x128xbf16>
    %3 = arith.extf %2 : vector<1x128xbf16> to vector<1x128xf32>
    %4 = arith.truncf %0 : vector<128x32xf32> to vector<128x32xbf16>
    %cst = arith.constant dense<0.000000e+00> : vector<128x128xf32>
    %5 = tpu.matmul %4, %1, %cst {dimension_numbers = #tpu.dot_dimension_numbers<[1], [0], [0], [1], [0, 0, 1, 1], [], []>} : vector<128x32xbf16>, vector<32x128xbf16>, vector<128x128xf32> -> vector<128x128xf32>
    %6 = vector.broadcast %3 : vector<1x128xf32> to vector<128x128xf32>
    %7 = arith.addf %5, %6 : vector<128x128xf32>
    %cst_5 = arith.constant 0.000000e+00 : f32
    %8 = vector.broadcast %cst_5 : f32 to vector<128x128xf32>
    %9 = arith.maximumf %7, %8 : vector<128x128xf32>
    %c32 = arith.constant 32 : index
    %c0_6 = arith.constant 0 : index
    %10 = vector.load %arg2[%c32, %c0_6] : memref<160x128xbf16, #tpu.memory_space<vmem>>, vector<128x128xbf16>
    %c1 = arith.constant 1 : index
    %c0_7 = arith.constant 0 : index
    %11 = vector.load %arg3[%c1, %c0_7] : memref<8x128xbf16, #tpu.memory_space<vmem>>, vector<1x128xbf16>
    %12 = arith.extf %11 : vector<1x128xbf16> to vector<1x128xf32>
    %13 = arith.truncf %9 : vector<128x128xf32> to vector<128x128xbf16>
    %cst_8 = arith.constant dense<0.000000e+00> : vector<128x128xf32>
    %14 = tpu.matmul %13, %10, %cst_8 {dimension_numbers = #tpu.dot_dimension_numbers<[1], [0], [0], [1], [0, 0, 1, 1], [], []>} : vector<128x128xbf16>, vector<128x128xbf16>, vector<128x128xf32> -> vector<128x128xf32>
    %15 = vector.broadcast %12 : vector<1x128xf32> to vector<128x128xf32>
    %16 = arith.addf %14, %15 : vector<128x128xf32>
    %cst_9 = arith.constant 0.000000e+00 : f32
    %17 = vector.broadcast %cst_9 : f32 to vector<128x128xf32>
    %18 = arith.maximumf %16, %17 : vector<128x128xf32>
    %19 = tpu.transpose %18, [1, 0] : vector<128x128xf32> -> vector<128x128xf32>
    %20 = arith.truncf %19 : vector<128x128xf32> to vector<128x128xbf16>
    %c2 = arith.constant 2 : index
    %c0_10 = arith.constant 0 : index
    %21 = vector.load %arg3[%c2, %c0_10] : memref<8x128xbf16, #tpu.memory_space<vmem>>, vector<1x128xbf16>
    %22 = vector.shape_cast %21 : vector<1x128xbf16> to vector<1x128xbf16>
    %23 = vector.broadcast %22 : vector<1x128xbf16> to vector<8x128xbf16>
    %cst_11 = arith.constant dense<0.000000e+00> : vector<8x128xf32>
    %24 = tpu.matmul %23, %20, %cst_11 {dimension_numbers = #tpu.dot_dimension_numbers<[1], [0], [0], [1], [0, 0, 1, 1], [], []>} : vector<8x128xbf16>, vector<128x128xbf16>, vector<8x128xf32> -> vector<8x128xf32>
    %25 = vector.extract_strided_slice %24 {offsets = [0, 0], sizes = [1, 128], strides = [1, 1]} : vector<8x128xf32> to vector<1x128xf32>
    %c0_12 = arith.constant 0 : index
    %c0_13 = arith.constant 0 : index
    %26 = vector.load %arg4[%c0_12, %c0_13] : memref<1x128xf32, #tpu.memory_space<vmem>>, vector<1x128xf32>
    tpu.vector_store %arg4[%c0_12, %c0_13], %25 {strides = array<i32>} : memref<1x128xf32, #tpu.memory_space<vmem>>, vector<1x128xf32>,
    return
  }
  func.func @transform_0(%arg0: i32) -> (i32, i32) {
    %c0_i32 = arith.constant 0 : i32
    %c0_i32_0 = arith.constant 0 : i32
    return %arg0, %c0_i32 : i32, i32
  }
  func.func @transform_1(%arg0: i32) -> (i32, i32) {
    %c0_i32 = arith.constant 0 : i32
    %c0_i32_0 = arith.constant 0 : i32
    %c0_i32_1 = arith.constant 0 : i32
    return %c0_i32, %c0_i32_0 : i32, i32
  }
  func.func @transform_2(%arg0: i32) -> (i32, i32) {
    %c0_i32 = arith.constant 0 : i32
    %c0_i32_0 = arith.constant 0 : i32
    %c0_i32_1 = arith.constant 0 : i32
    return %c0_i32, %c0_i32_0 : i32, i32
  }
  func.func @transform_3(%arg0: i32) -> (i32, i32) {
    %c0_i32 = arith.constant 0 : i32
    %c0_i32_0 = arith.constant 0 : i32
    return %c0_i32, %arg0 : i32, i32
  }
}

</mosaic_0001>

<llo_original>
// kernel: tpu_custom_call.1
$region0: #{tpu_custom_call.1}
  #allocation0 [shape = 'u32[]', space=smem, size = 0x4, offset = 0x4, fixed_abs, tag = 'smem constant byte address 0x4 - core index']
  #allocation1 [shape = 'u32[144,128]{1,0:T(1,128)}', space=vmem, size = 0x12000, scoped, tag = 'internal scratch']
  %s0 = inlined_call_operand.vmem [shape: f32[200,32], index: 0, kind: input, shape index: {}]
  %s1 = inlined_call_operand.vmem [shape: bf16[160,128], index: 1, kind: input, shape index: {}]
  %s2 = inlined_call_operand.vmem [shape: bf16[8,128], index: 2, kind: input, shape index: {}]
  %s3 = inlined_call_operand.hbm [shape: f32[1,256], index: 3, kind: output, shape index: {}]
  %s4 = sld [smem:[#allocation0]]
  $region45: #{tpu_custom_call.1} parent=0
    _
  %s6 = ssub.s32 1, %s4
  %s7 = scalar_select 0, %s6, %s4
  $region1: #{tpu_custom_call.1} parent=0
    #allocation2 [shape = 'u8[1024]{0}', space=vmem, size = 0x400, scoped, tag = 'output window, operand 0']
    #allocation3 [shape = 's32[2]{0}', space=sflag, size = 0x8, scoped, tag = 'scoped memory for tpu_custom_call.1']
    %8 = vsyncpa [#allocation3], 0
    %s9 = scalar_lea.sflag [#allocation3], 1
    %10 = vsyncpa %s9, 0
    loop: start=0, step=1, limit=4
    $region2: #{tpu_custom_call.1} parent=1 // loop_pre_header
      _
    $region3: #{tpu_custom_call.1} parent=1 // loop_header
      %s12 = sphi 0, %s16
      %p13 = scmp.ge.s32.totalorder %s12, 4
      %s22 = sphi 0, %s24
      %s25 = sphi 0, %s22
      %s26 = sphi 0, %s25
      %s42 = sphi 0, %s26
      %s46 = sphi 0, %s46
      %s48 = sphi 0, %s46
      %s49 = sphi 0, %s48
      %s63 = sphi 0, %s49
      %s67 = sphi 0, %s67
      %s69 = sphi 0, %s67
      %s70 = sphi 0, %s69
      %s84 = sphi 0, %s70
      %s90 = sphi 0, %s92
      %s93 = sphi 0, %s90
      %s94 = sphi 0, %s93
      %s110 = sphi 0, %s94
    $region4: #{tpu_custom_call.1} parent=1 // loop_header_branch
      %15 = sbr.rel (%p13) target = $region8
    $region5: #{tpu_custom_call.1} parent=1 // loop_body
      %s17 = ssub.s32 %s12, 1
      %s18 = ssub.s32 %s12, 2
      %s19 = sadd.s32 %s12, 1
      %s20 = ssub.s32 %s12, %s19
      %p21 = scmp.eq.s32.totalorder %s20, 0
      %s23 = sadd.s32 %s22, 1
      %s24 = scalar_select %p21, %s22, %s23
      %p27 = pneg %p21
      %p28 = scmp.eq.s32.totalorder %s12, 1
      %p29 = por %p27, %p28
      %p30 = scmp.ne.s32.totalorder %s22, %s25
      %p31 = scmp.eq.s32.totalorder %s12, 0
      %p32 = por %p30, %p31
      %p33 = scmp.ne.s32.totalorder %s22, %s25
      %p34 = scmp.eq.s32.totalorder %s17, 1
      %p35 = por %p33, %p34
      %p36 = scmp.ne.s32.totalorder %s25, %s26
      %p37 = scmp.eq.s32.totalorder %s17, 0
      %p38 = por %p36, %p37
      %p39 = scmp.ne.s32.totalorder %s25, %s26
      %p40 = scmp.eq.s32.totalorder %s18, 1
      %p41 = por %p39, %p40
      %p43 = scmp.ne.s32.totalorder %s26, %s42
      %p44 = scmp.eq.s32.totalorder %s18, 0
      %p45 = por %p43, %p44
      %s47 = sadd.s32 %s46, 1
      %p50 = scmp.eq.s32.totalorder %s12, 1
      %p51 = scmp.ne.s32.totalorder %s46, %s48
      %p52 = scmp.eq.s32.totalorder %s12, 0
      %p53 = por %p51, %p52
      %p54 = scmp.ne.s32.totalorder %s46, %s48
      %p55 = scmp.eq.s32.totalorder %s17, 1
      %p56 = por %p54, %p55
      %p57 = scmp.ne.s32.totalorder %s48, %s49
      %p58 = scmp.eq.s32.totalorder %s17, 0
      %p59 = por %p57, %p58
      %p60 = scmp.ne.s32.totalorder %s48, %s49
      %p61 = scmp.eq.s32.totalorder %s18, 1
      %p62 = por %p60, %p61
      %p64 = scmp.ne.s32.totalorder %s49, %s63
      %p65 = scmp.eq.s32.totalorder %s18, 0
      %p66 = por %p64, %p65
      %s68 = sadd.s32 %s67, 1
      %p71 = scmp.eq.s32.totalorder %s12, 1
      %p72 = scmp.ne.s32.totalorder %s67, %s69
      %p73 = scmp.eq.s32.totalorder %s12, 0
      %p74 = por %p72, %p73
      %p75 = scmp.ne.s32.totalorder %s67, %s69
      %p76 = scmp.eq.s32.totalorder %s17, 1
      %p77 = por %p75, %p76
      %p78 = scmp.ne.s32.totalorder %s69, %s70
      %p79 = scmp.eq.s32.totalorder %s17, 0
      %p80 = por %p78, %p79
      %p81 = scmp.ne.s32.totalorder %s69, %s70
      %p82 = scmp.eq.s32.totalorder %s18, 1
      %p83 = por %p81, %p82
      %p85 = scmp.ne.s32.totalorder %s70, %s84
      %p86 = scmp.eq.s32.totalorder %s18, 0
      %p87 = por %p85, %p86
      %s88 = ssub.s32 %s12, %s19
      %p89 = scmp.eq.s32.totalorder %s88, 0
      %s91 = sadd.s32 %s90, 1
      %s92 = scalar_select %p89, %s90, %s91
      %p95 = pneg %p89
      %p96 = scmp.eq.s32.totalorder %s12, 1
      %p97 = por %p95, %p96
      %p98 = scmp.ne.s32.totalorder %s90, %s93
      %p99 = scmp.eq.s32.totalorder %s12, 0
      %p100 = por %p98, %p99
      %p101 = scmp.ne.s32.totalorder %s90, %s93
      %p102 = scmp.eq.s32.totalorder %s17, 1
      %p103 = por %p101, %p102
      %p104 = scmp.ne.s32.totalorder %s93, %s94
      %p105 = scmp.eq.s32.totalorder %s17, 0
      %p106 = por %p104, %p105
      %p107 = scmp.ne.s32.totalorder %s93, %s94
      %p108 = scmp.eq.s32.totalorder %s18, 1
      %p109 = por %p107, %p108
      %p111 = scmp.ne.s32.totalorder %s94, %s110
      %p112 = scmp.eq.s32.totalorder %s18, 0
      %p113 = por %p111, %p112
      %p114 = scmp.le.s32.totalorder 1, %s12
      %p115 = scmp.lt.s32.totalorder %s12, 3
      %p116 = pnand %p114, %p115
      %p117 = pneg %p116
      // Predicated region
      $region9: #{tpu_custom_call.1} parent=5 // pred_check
        _
      $region10: #{tpu_custom_call.1} parent=5 // pred_check_branch
        %119 = sbr.rel (%p116) target = $region12
      $region11: #{tpu_custom_call.1} parent=5 // pred_region
        %s120 = ssub.s32 %s12, 1
        // Predicated region
        $region13: #{tpu_custom_call.1} parent=11 // pred_check
          %p121 = pneg %p59
        $region14: #{tpu_custom_call.1} parent=11 // pred_check_branch
          %123 = sbr.rel (%p121) target = $region16
        $region15: #{tpu_custom_call.1} parent=11 // pred_region
          _
        $region16: #{tpu_custom_call.1} parent=11 // pred_fallthru
          _
        // Predicated region
        $region17: #{tpu_custom_call.1} parent=11 // pred_check
          %p124 = pneg %p80
        $region18: #{tpu_custom_call.1} parent=11 // pred_check_branch
          %126 = sbr.rel (%p124) target = $region20
        $region19: #{tpu_custom_call.1} parent=11 // pred_region
          _
        $region20: #{tpu_custom_call.1} parent=11 // pred_fallthru
          _
      $region12: #{tpu_custom_call.1} parent=5 // pred_fallthru
        _
      %p127 = scmp.lt.s32.totalorder %s12, 2
      // Predicated region
      $region21: #{tpu_custom_call.1} parent=5 // pred_check
        %p128 = pneg %p127
      $region22: #{tpu_custom_call.1} parent=5 // pred_check_branch
        %130 = sbr.rel (%p128) target = $region24
      $region23: #{tpu_custom_call.1} parent=5 // pred_region
        // Predicated region
        $region25: #{tpu_custom_call.1} parent=23 // pred_check
          %p131 = pneg %p32
        $region26: #{tpu_custom_call.1} parent=23 // pred_check_branch
          %133 = sbr.rel (%p131) target = $region28
        $region27: #{tpu_custom_call.1} parent=23 // pred_region
          %s134 = smul.u32 16, %s12
          %s135 = ssub.s32 25, %s134
          %p136 = scmp.lt.s32.totalorder %s135, 16
          %s137 = scalar_select %p136, %s135, 16
          %s138 = smul.u32 128, %s137
          %p139 = scmp.lt.s32.totalorder %s134, 24
          %s140 = scalar_select %p139, %s134, 24
          %s141 = smul.addr %s140, 8
          %s142 = scalar_lea.vmem %s0, %s141
          %s143 = smul.u32 16, %s12
          %s144 = ssub.s32 25, %s143
          %p145 = scmp.lt.s32.totalorder %s144, 16
          %s146 = scalar_select %p145, %s144, 16
          %s147 = smul.u32 128, %s146
        $region28: #{tpu_custom_call.1} parent=23 // pred_fallthru
          _
      $region24: #{tpu_custom_call.1} parent=5 // pred_fallthru
        _
      %p148 = scmp.le.s32.totalorder 1, %s12
      %p149 = scmp.lt.s32.totalorder %s12, 3
      %p150 = pnand %p148, %p149
      %p151 = pneg %p150
      // Predicated region
      $region29: #{tpu_custom_call.1} parent=5 // pred_check
        _
      $region30: #{tpu_custom_call.1} parent=5 // pred_check_branch
        %153 = sbr.rel (%p150) target = $region32
      $region31: #{tpu_custom_call.1} parent=5 // pred_region
        %s154 = ssub.s32 %s12, 1
        %s155 = smul.u32 16, %s17
        %s156 = ssub.s32 25, %s155
        %p157 = scmp.lt.s32.totalorder %s156, 16
        %s158 = scalar_select %p157, %s156, 16
        %s159 = smul.u32 128, %s158
        %p160 = scmp.lt.s32.totalorder %s155, 24
        %s161 = scalar_select %p160, %s155, 24
        %s162 = smul.addr %s161, 8
        %s163 = scalar_lea.vmem %s0, %s162
        %p164 = pneg %p38
        %p165 = pneg %p35
        %p166 = pneg %p59
        %p167 = pneg %p56
        %p168 = pneg %p80
        %p169 = pneg %p77
        %p170 = pneg %p106
        %p171 = pneg %p103
        %s172 = sand.u32 %s93, 1
        %s173 = scalar_lea.sflag [#allocation3], %s172
        %s174 = sand.u32 %s93, 1
        %s175 = scalar_lea.vmem [#allocation2], %s174
        %s176 = smul.u32 16, %s17
        %s177 = ssub.s32 25, %s176
        %p178 = scmp.lt.s32.totalorder %s177, 16
        %s179 = scalar_select %p178, %s177, 16
        %s180 = smul.u32 128, %s179
        %p181 = scmp.lt.s32.totalorder %s176, 24
        %s182 = scalar_select %p181, %s176, 24
        %s183 = smul.addr %s182, 8
        %s184 = scalar_lea.vmem %s0, %s183
        %s185 = smul.u32 16, %s17
        %s186 = ssub.s32 25, %s185
        %p187 = scmp.lt.s32.totalorder %s186, 16
        %s188 = scalar_select %p187, %s186, 16
        %s189 = smul.u32 128, %s188
        %v191 = vld [vmem:[%s184] sm:$0xff]
        %v192 = vld [vmem:[%s184 + $0x8] sm:$0xff]
        %v193 = vld [vmem:[%s184 + $0x10] sm:$0xff]
        %v194 = vld [vmem:[%s184 + $0x18] sm:$0xff]
        %v195 = vld [vmem:[%s184 + $0x20] sm:$0xff]
        %v196 = vld [vmem:[%s184 + $0x28] sm:$0xff]
        %v197 = vld [vmem:[%s184 + $0x30] sm:$0xff]
        %v198 = vld [vmem:[%s184 + $0x38] sm:$0xff]
        %v199 = vld [vmem:[%s184 + $0x40] sm:$0xff]
        %v200 = vld [vmem:[%s184 + $0x48] sm:$0xff]
        %v201 = vld [vmem:[%s184 + $0x50] sm:$0xff]
        %v202 = vld [vmem:[%s184 + $0x58] sm:$0xff]
        %v203 = vld [vmem:[%s184 + $0x60] sm:$0xff]
        %v204 = vld [vmem:[%s184 + $0x68] sm:$0xff]
        %v205 = vld [vmem:[%s184 + $0x70] sm:$0xff]
        %v206 = vld [vmem:[%s184 + $0x78] sm:$0xff]
        %v207 = vld [vmem:[%s1] sm:$0xf]
        %v208 = vld [vmem:[%s1 + $0x4] sm:$0xf]
        %v209 = vld [vmem:[%s1 + $0x8] sm:$0xf]
        %v210 = vld [vmem:[%s1 + $0xc] sm:$0xf]
        %v211 = vld [vmem:[%s2] sm:$0x1]
        %v212 = vunpack.c.l.bf16 %v211
        %v213 = vpack.c.bf16 %v192, %v191
        %v214 = vpack.c.bf16 %v194, %v193
        %v215 = vpack.c.bf16 %v196, %v195
        %v216 = vpack.c.bf16 %v198, %v197
        %v217 = vpack.c.bf16 %v200, %v199
        %v218 = vpack.c.bf16 %v202, %v201
        %v219 = vpack.c.bf16 %v204, %v203
        %v220 = vpack.c.bf16 %v206, %v205
        %v221 = vlaneseq
        %v222 = vshrl.u32 %v221, 7
        %v223 = vsub.s32 0, %v222
        %v224 = vrot.slane %v212, %v223
        %v229 = vunpack.c.l.b16 %v207
        %v230 = vunpack.c.l.b16 %v208
        %v231 = vunpack.c.l.b16 %v209
        %v232 = vunpack.c.l.b16 %v210
        %v233 = vpack.c.b16 %v230, %v229
        %v234 = vpack.c.b16 %v232, %v231
        %vm237 = vcmask 261120
        %v239 = vsel %vm237, %v213, 0
        %v242 = vsel %vm237, %v214, 0
        %v245 = vsel %vm237, %v215, 0
        %v248 = vsel %vm237, %v216, 0
        %v251 = vsel %vm237, %v217, 0
        %v254 = vsel %vm237, %v218, 0
        %v257 = vsel %vm237, %v219, 0
        %v260 = vsel %vm237, %v220, 0
        %262 = vmatprep.subr.bf16.mxu0 0
        %263 = vmatpush1.bf16.msra.mxu0 %v233
        %264 = vmatprep.subr.bf16.mxu0 0
        %265 = vmatpush1.bf16.msra.mxu0 %v234
        %266 = vmatprep.subr.bf16.mxu0 0
        %267 = vmatpush1.bf16.msra.mxu0 0
        %268 = vmatprep.subr.bf16.mxu0 0
        %269 = vmatpush1.bf16.msra.mxu0 0
        %270 = vmatprep.subr.bf16.mxu0 0
        %271 = vmatpush1.bf16.msra.mxu0 0
        %272 = vmatprep.subr.bf16.mxu0 0
        %273 = vmatpush1.bf16.msra.mxu0 0
        %274 = vmatprep.subr.bf16.mxu0 0
        %275 = vmatpush1.bf16.msra.mxu0 0
        %276 = vmatprep.subr.bf16.mxu0 0
        %277 = vmatpush1.bf16.msra.mxu0 0
        %278 = vmatprep.subr.bf16.mxu0 0
        %279 = vmatpush1.bf16.msra.mxu0 0
        %280 = vmatprep.subr.bf16.mxu0 0
        %281 = vmatpush1.bf16.msra.mxu0 0
        %282 = vmatprep.subr.bf16.mxu0 0
        %283 = vmatpush1.bf16.msra.mxu0 0
        %284 = vmatprep.subr.bf16.mxu0 0
        %285 = vmatpush1.bf16.msra.mxu0 0
        %286 = vmatprep.subr.bf16.mxu0 0
        %287 = vmatpush1.bf16.msra.mxu0 0
        %288 = vmatprep.subr.bf16.mxu0 0
        %289 = vmatpush1.bf16.msra.mxu0 0
        %290 = vmatprep.subr.bf16.mxu0 0
        %291 = vmatpush1.bf16.msra.mxu0 0
        %292 = vmatprep.subr.bf16.mxu0 0
        %293 = vmatpush1.bf16.msra.mxu0 0
        %294 = vmatprep.mubr.bf16.mxu0 0
        %295 = vmatmul.mubr.bf16.gmra.mrb[0].mxu0 %v239
        %v296 = vpop.f32.mrb[0].mxu0
        %v297 = vadd.f32 %v224, %v296
        %v298 = vpop.f32.mrb[0].mxu0
        %v299 = vpop.f32.mrb[0].mxu0
        %v300 = vadd.f32 %v224, %v299
        %v301 = vpop.f32.mrb[0].mxu0
        %302 = vmatprep.mubr.bf16.mxu0 0
        %303 = vmatmul.mubr.bf16.gmra.mrb[0].mxu0 %v242
        %v304 = vpop.f32.mrb[0].mxu0
        %v305 = vadd.f32 %v224, %v304
        %v306 = vpop.f32.mrb[0].mxu0
        %v307 = vpop.f32.mrb[0].mxu0
        %v308 = vadd.f32 %v224, %v307
        %v309 = vpop.f32.mrb[0].mxu0
        %310 = vmatprep.mubr.bf16.mxu0 0
        %311 = vmatmul.mubr.bf16.gmra.mrb[0].mxu0 %v245
        %v312 = vpop.f32.mrb[0].mxu0
        %v313 = vadd.f32 %v224, %v312
        %v314 = vpop.f32.mrb[0].mxu0
        %v315 = vpop.f32.mrb[0].mxu0
        %v316 = vadd.f32 %v224, %v315
        %v317 = vpop.f32.mrb[0].mxu0
        %318 = vmatprep.mubr.bf16.mxu0 0
        %319 = vmatmul.mubr.bf16.gmra.mrb[0].mxu0 %v248
        %v320 = vpop.f32.mrb[0].mxu0
        %v321 = vadd.f32 %v224, %v320
        %v322 = vpop.f32.mrb[0].mxu0
        %v323 = vpop.f32.mrb[0].mxu0
        %v324 = vadd.f32 %v224, %v323
        %v325 = vpop.f32.mrb[0].mxu0
        %326 = vmatprep.mubr.bf16.mxu0 0
        %327 = vmatmul.mubr.bf16.gmra.mrb[0].mxu0 %v251
        %v328 = vpop.f32.mrb[0].mxu0
        %v329 = vadd.f32 %v224, %v328
        %v330 = vpop.f32.mrb[0].mxu0
        %v331 = vpop.f32.mrb[0].mxu0
        %v332 = vadd.f32 %v224, %v331
        %v333 = vpop.f32.mrb[0].mxu0
        %334 = vmatprep.mubr.bf16.mxu0 0
        %335 = vmatmul.mubr.bf16.gmra.mrb[0].mxu0 %v254
        %v336 = vpop.f32.mrb[0].mxu0
        %v337 = vadd.f32 %v224, %v336
        %v338 = vpop.f32.mrb[0].mxu0
        %v339 = vpop.f32.mrb[0].mxu0
        %v340 = vadd.f32 %v224, %v339
        %v341 = vpop.f32.mrb[0].mxu0
        %342 = vmatprep.mubr.bf16.mxu0 0
        %343 = vmatmul.mubr.bf16.gmra.mrb[0].mxu0 %v257
        %v344 = vpop.f32.mrb[0].mxu0
        %v345 = vadd.f32 %v224, %v344
        %v346 = vpop.f32.mrb[0].mxu0
        %v347 = vpop.f32.mrb[0].mxu0
        %v348 = vadd.f32 %v224, %v347
        %v349 = vpop.f32.mrb[0].mxu0
        %350 = vmatprep.mubr.bf16.mxu0 0
        %351 = vmatmul.mubr.bf16.gmra.mrb[0].mxu0 %v260
        %v352 = vpop.f32.mrb[0].mxu0
        %v353 = vadd.f32 %v224, %v352
        %v354 = vpop.f32.mrb[0].mxu0
        %v355 = vpop.f32.mrb[0].mxu0
        %v356 = vadd.f32 %v224, %v355
        %v357 = vpop.f32.mrb[0].mxu0
        %358 = vdwg.mxu0
        %v359 = vmax.f32 %v297, 0.0
        %v360 = vmax.f32 %v300, 0.0
        %v361 = vmax.f32 %v305, 0.0
        %v362 = vmax.f32 %v308, 0.0
        %v363 = vmax.f32 %v313, 0.0
        %v364 = vmax.f32 %v316, 0.0
        %v365 = vmax.f32 %v321, 0.0
        %v366 = vmax.f32 %v324, 0.0
        %v367 = vmax.f32 %v329, 0.0
        %v368 = vmax.f32 %v332, 0.0
        %v369 = vmax.f32 %v337, 0.0
        %v370 = vmax.f32 %v340, 0.0
        %v371 = vmax.f32 %v345, 0.0
        %v372 = vmax.f32 %v348, 0.0
        %v373 = vmax.f32 %v353, 0.0
        %v374 = vmax.f32 %v356, 0.0
        %v375 = vld [vmem:[%s1 + $0x10] sm:$0xf]
        %v376 = vld [vmem:[%s1 + $0x14] sm:$0xf]
        %v377 = vld [vmem:[%s1 + $0x18] sm:$0xf]
        %v378 = vld [vmem:[%s1 + $0x1c] sm:$0xf]
        %v379 = vld [vmem:[%s1 + $0x20] sm:$0xf]
        %v380 = vld [vmem:[%s1 + $0x24] sm:$0xf]
        %v381 = vld [vmem:[%s1 + $0x28] sm:$0xf]
        %v382 = vld [vmem:[%s1 + $0x2c] sm:$0xf]
        %v383 = vld [vmem:[%s1 + $0x30] sm:$0xf]
        %v384 = vld [vmem:[%s1 + $0x34] sm:$0xf]
        %v385 = vld [vmem:[%s1 + $0x38] sm:$0xf]
        %v386 = vld [vmem:[%s1 + $0x3c] sm:$0xf]
        %v387 = vld [vmem:[%s1 + $0x40] sm:$0xf]
        %v388 = vld [vmem:[%s1 + $0x44] sm:$0xf]
        %v389 = vld [vmem:[%s1 + $0x48] sm:$0xf]
        %v390 = vld [vmem:[%s1 + $0x4c] sm:$0xf]
        %v391 = vpack.c.bf16 %v360, %v359
        %v392 = vpack.c.bf16 %v362, %v361
        %v393 = vpack.c.bf16 %v364, %v363
        %v394 = vpack.c.bf16 %v366, %v365
        %v395 = vpack.c.bf16 %v368, %v367
        %v396 = vpack.c.bf16 %v370, %v369
        %v397 = vpack.c.bf16 %v372, %v371
        %v398 = vpack.c.bf16 %v374, %v373
        %v399 = vlaneseq
        %v400 = vshrl.u32 %v399, 7
        %v401 = vsub.s32 1, %v400
        %v402 = vrot.slane %v212, %v401
        %v419 = vunpack.c.l.b16 %v375
        %v420 = vunpack.c.l.b16 %v376
        %v421 = vunpack.c.l.b16 %v377
        %v422 = vunpack.c.l.b16 %v378
        %v423 = vunpack.c.l.b16 %v379
        %v424 = vunpack.c.l.b16 %v380
        %v425 = vunpack.c.l.b16 %v381
        %v426 = vunpack.c.l.b16 %v382
        %v427 = vunpack.c.l.b16 %v383
        %v428 = vunpack.c.l.b16 %v384
        %v429 = vunpack.c.l.b16 %v385
        %v430 = vunpack.c.l.b16 %v386
        %v431 = vunpack.c.l.b16 %v387
        %v432 = vunpack.c.l.b16 %v388
        %v433 = vunpack.c.l.b16 %v389
        %v434 = vunpack.c.l.b16 %v390
        %v435 = vpack.c.b16 %v420, %v419
        %v436 = vpack.c.b16 %v422, %v421
        %v437 = vpack.c.b16 %v424, %v423
        %v438 = vpack.c.b16 %v426, %v425
        %v439 = vpack.c.b16 %v428, %v427
        %v440 = vpack.c.b16 %v430, %v429
        %v441 = vpack.c.b16 %v432, %v431
        %v442 = vpack.c.b16 %v434, %v433
        %451 = vmatprep.subr.bf16.mxu0 0
        %452 = vmatpush1.bf16.msra.mxu0 %v435
        %453 = vmatprep.subr.bf16.mxu0 0
        %454 = vmatpush1.bf16.msra.mxu0 %v436
        %455 = vmatprep.subr.bf16.mxu0 0
        %456 = vmatpush1.bf16.msra.mxu0 %v437
        %457 = vmatprep.subr.bf16.mxu0 0
        %458 = vmatpush1.bf16.msra.mxu0 %v438
        %459 = vmatprep.subr.bf16.mxu0 0
        %460 = vmatpush1.bf16.msra.mxu0 %v439
        %461 = vmatprep.subr.bf16.mxu0 0
        %462 = vmatpush1.bf16.msra.mxu0 %v440
        %463 = vmatprep.subr.bf16.mxu0 0
        %464 = vmatpush1.bf16.msra.mxu0 %v441
        %465 = vmatprep.subr.bf16.mxu0 0
        %466 = vmatpush1.bf16.msra.mxu0 %v442
        %467 = vmatprep.subr.bf16.mxu0 0
        %468 = vmatpush1.bf16.msra.mxu0 0
        %469 = vmatprep.subr.bf16.mxu0 0
        %470 = vmatpush1.bf16.msra.mxu0 0
        %471 = vmatprep.subr.bf16.mxu0 0
        %472 = vmatpush1.bf16.msra.mxu0 0
        %473 = vmatprep.subr.bf16.mxu0 0
        %474 = vmatpush1.bf16.msra.mxu0 0
        %475 = vmatprep.subr.bf16.mxu0 0
        %476 = vmatpush1.bf16.msra.mxu0 0
        %477 = vmatprep.subr.bf16.mxu0 0
        %478 = vmatpush1.bf16.msra.mxu0 0
        %479 = vmatprep.subr.bf16.mxu0 0
        %480 = vmatpush1.bf16.msra.mxu0 0
        %481 = vmatprep.subr.bf16.mxu0 0
        %482 = vmatpush1.bf16.msra.mxu0 0
        %483 = vmatprep.mubr.bf16.mxu0 0
        %484 = vmatmul.mubr.bf16.gmra.mrb[0].mxu0 %v391
        %v485 = vpop.f32.mrb[0].mxu0
        %v486 = vadd.f32 %v402, %v485
        %v487 = vpop.f32.mrb[0].mxu0
        %v488 = vpop.f32.mrb[0].mxu0
        %v489 = vadd.f32 %v402, %v488
        %v490 = vpop.f32.mrb[0].mxu0
        %491 = vmatprep.mubr.bf16.mxu0 0
        %492 = vmatmul.mubr.bf16.gmra.mrb[0].mxu0 %v392
        %v493 = vpop.f32.mrb[0].mxu0
        %v494 = vadd.f32 %v402, %v493
        %v495 = vpop.f32.mrb[0].mxu0
        %v496 = vpop.f32.mrb[0].mxu0
        %v497 = vadd.f32 %v402, %v496
        %v498 = vpop.f32.mrb[0].mxu0
        %499 = vmatprep.mubr.bf16.mxu0 0
        %500 = vmatmul.mubr.bf16.gmra.mrb[0].mxu0 %v393
        %v501 = vpop.f32.mrb[0].mxu0
        %v502 = vadd.f32 %v402, %v501
        %v503 = vpop.f32.mrb[0].mxu0
        %v504 = vpop.f32.mrb[0].mxu0
        %v505 = vadd.f32 %v402, %v504
        %v506 = vpop.f32.mrb[0].mxu0
        %507 = vmatprep.mubr.bf16.mxu0 0
        %508 = vmatmul.mubr.bf16.gmra.mrb[0].mxu0 %v394
        %v509 = vpop.f32.mrb[0].mxu0
        %v510 = vadd.f32 %v402, %v509
        %v511 = vpop.f32.mrb[0].mxu0
        %v512 = vpop.f32.mrb[0].mxu0
        %v513 = vadd.f32 %v402, %v512
        %v514 = vpop.f32.mrb[0].mxu0
        %515 = vmatprep.mubr.bf16.mxu0 0
        %516 = vmatmul.mubr.bf16.gmra.mrb[0].mxu0 %v395
        %v517 = vpop.f32.mrb[0].mxu0
        %v518 = vadd.f32 %v402, %v517
        %v519 = vpop.f32.mrb[0].mxu0
        %v520 = vpop.f32.mrb[0].mxu0
        %v521 = vadd.f32 %v402, %v520
        %v522 = vpop.f32.mrb[0].mxu0
        %523 = vmatprep.mubr.bf16.mxu0 0
        %524 = vmatmul.mubr.bf16.gmra.mrb[0].mxu0 %v396
        %v525 = vpop.f32.mrb[0].mxu0
        %v526 = vadd.f32 %v402, %v525
        %v527 = vpop.f32.mrb[0].mxu0
        %v528 = vpop.f32.mrb[0].mxu0
        %v529 = vadd.f32 %v402, %v528
        %v530 = vpop.f32.mrb[0].mxu0
        %531 = vmatprep.mubr.bf16.mxu0 0
        %532 = vmatmul.mubr.bf16.gmra.mrb[0].mxu0 %v397
        %v533 = vpop.f32.mrb[0].mxu0
        %v534 = vadd.f32 %v402, %v533
        %v535 = vpop.f32.mrb[0].mxu0
        %v536 = vpop.f32.mrb[0].mxu0
        %v537 = vadd.f32 %v402, %v536
        %v538 = vpop.f32.mrb[0].mxu0
        %539 = vmatprep.mubr.bf16.mxu0 0
        %540 = vmatmul.mubr.bf16.gmra.mrb[0].mxu0 %v398
        %v541 = vpop.f32.mrb[0].mxu0
        %v542 = vadd.f32 %v402, %v541
        %v543 = vpop.f32.mrb[0].mxu0
        %v544 = vpop.f32.mrb[0].mxu0
        %v545 = vadd.f32 %v402, %v544
        %v546 = vpop.f32.mrb[0].mxu0
        %547 = vdwg.mxu0
        %v548 = vmax.f32 %v486, 0.0
        %v549 = vmax.f32 %v489, 0.0
        %v550 = vmax.f32 %v494, 0.0
        %v551 = vmax.f32 %v497, 0.0
        %v552 = vmax.f32 %v502, 0.0
        %v553 = vmax.f32 %v505, 0.0
        %v554 = vmax.f32 %v510, 0.0
        %v555 = vmax.f32 %v513, 0.0
        %v556 = vmax.f32 %v518, 0.0
        %v557 = vmax.f32 %v521, 0.0
        %v558 = vmax.f32 %v526, 0.0
        %v559 = vmax.f32 %v529, 0.0
        %v560 = vmax.f32 %v534, 0.0
        %v561 = vmax.f32 %v537, 0.0
        %v562 = vmax.f32 %v542, 0.0
        %v563 = vmax.f32 %v545, 0.0
        %564 = vxpose.xlu0.b32.start [1/16] %v548, 128
        %565 = vxpose.xlu0.b32.cont [2/16] %v549, 128
        %566 = vxpose.xlu0.b32.cont [3/16] %v550, 128
        %567 = vxpose.xlu0.b32.cont [4/16] %v551, 128
        %568 = vxpose.xlu0.b32.cont [5/16] %v552, 128
        %569 = vxpose.xlu0.b32.cont [6/16] %v553, 128
        %570 = vxpose.xlu0.b32.cont [7/16] %v554, 128
        %571 = vxpose.xlu0.b32.cont [8/16] %v555, 128
        %572 = vxpose.xlu0.b32.cont [9/16] %v556, 128
        %573 = vxpose.xlu0.b32.cont [10/16] %v557, 128
        %574 = vxpose.xlu0.b32.cont [11/16] %v558, 128
        %575 = vxpose.xlu0.b32.cont [12/16] %v559, 128
        %576 = vxpose.xlu0.b32.cont [13/16] %v560, 128
        %577 = vxpose.xlu0.b32.cont [14/16] %v561, 128
        %578 = vxpose.xlu0.b32.cont [15/16] %v562, 128
        %579 = vxpose.xlu0.b32.end [16/16] %v563, 128
        %v580 = vpop.trf.xlu0
        %v581 = vpop.trf.xlu0
        %v582 = vpop.trf.xlu0
        %v583 = vpop.trf.xlu0
        %v584 = vpop.trf.xlu0
        %v585 = vpop.trf.xlu0
        %v586 = vpop.trf.xlu0
        %v587 = vpop.trf.xlu0
        %v588 = vpop.trf.xlu0
        %v589 = vpop.trf.xlu0
        %v590 = vpop.trf.xlu0
        %v591 = vpop.trf.xlu0
        %v592 = vpop.trf.xlu0
        %v593 = vpop.trf.xlu0
        %v594 = vpop.trf.xlu0
        %v595 = vpop.trf.xlu0
        %v596 = vpack.c.bf16 %v581, %v580
        %v597 = vpack.c.bf16 %v583, %v582
        %v598 = vpack.c.bf16 %v585, %v584
        %v599 = vpack.c.bf16 %v587, %v586
        %v600 = vpack.c.bf16 %v589, %v588
        %v601 = vpack.c.bf16 %v591, %v590
        %v602 = vpack.c.bf16 %v593, %v592
        %v603 = vpack.c.bf16 %v595, %v594
        %v604 = vld [vmem:[%s2] sm:$0x2]
        %v606 = vpack.i.b16 %v604, %v604
        %v608 = vlaneseq
        %v609 = vshrl.u32 %v608, 7
        %v610 = vsub.s32 1, %v609
        %v611 = vrot.slane %v606, %v610
        %612 = vmatprep.subr.bf16.mxu0 0
        %613 = vmatpush1.bf16.msra.mxu0 %v596
        %614 = vmatprep.subr.bf16.mxu0 0
        %615 = vmatpush1.bf16.msra.mxu0 %v597
        %616 = vmatprep.subr.bf16.mxu0 0
        %617 = vmatpush1.bf16.msra.mxu0 %v598
        %618 = vmatprep.subr.bf16.mxu0 0
        %619 = vmatpush1.bf16.msra.mxu0 %v599
        %620 = vmatprep.subr.bf16.mxu0 0
        %621 = vmatpush1.bf16.msra.mxu0 %v600
        %622 = vmatprep.subr.bf16.mxu0 0
        %623 = vmatpush1.bf16.msra.mxu0 %v601
        %624 = vmatprep.subr.bf16.mxu0 0
        %625 = vmatpush1.bf16.msra.mxu0 %v602
        %626 = vmatprep.subr.bf16.mxu0 0
        %627 = vmatpush1.bf16.msra.mxu0 %v603
        %628 = vmatprep.subr.bf16.mxu0 0
        %629 = vmatpush1.bf16.msra.mxu0 0
        %630 = vmatprep.subr.bf16.mxu0 0
        %631 = vmatpush1.bf16.msra.mxu0 0
        %632 = vmatprep.subr.bf16.mxu0 0
        %633 = vmatpush1.bf16.msra.mxu0 0
        %634 = vmatprep.subr.bf16.mxu0 0
        %635 = vmatpush1.bf16.msra.mxu0 0
        %636 = vmatprep.subr.bf16.mxu0 0
        %637 = vmatpush1.bf16.msra.mxu0 0
        %638 = vmatprep.subr.bf16.mxu0 0
        %639 = vmatpush1.bf16.msra.mxu0 0
        %640 = vmatprep.subr.bf16.mxu0 0
        %641 = vmatpush1.bf16.msra.mxu0 0
        %642 = vmatprep.subr.bf16.mxu0 0
        %643 = vmatpush1.bf16.msra.mxu0 0
        %644 = vmatprep.mubr.bf16.mxu0 0
        %645 = vmatmul.mubr.bf16.gmra.mrb[0].mxu0 %v611
        %v646 = vpop.f32.mrb[0].mxu0
        %v647 = vadd.f32 0.0, %v646
        %v648 = vpop.f32.mrb[0].mxu0
        %v649 = vpop.f32.mrb[0].mxu0
        %v650 = vpop.f32.mrb[0].mxu0
        %651 = vdwg.mxu0
        %652 = vst [vmem:[%s175] sm:$0x1] %v647
        %s653 = sand.u32 %s93, 1
        %s654 = scalar_lea.sflag [#allocation3], %s653
        %s655 = sand.u32 %s93, 1
        %s656 = scalar_lea.vmem [#allocation2], %s655
        // Predicated region
        $region33: #{tpu_custom_call.1} parent=31 // pred_check
          %p657 = pneg %p103
        $region34: #{tpu_custom_call.1} parent=31 // pred_check_branch
          %659 = sbr.rel (%p657) target = $region36
        $region35: #{tpu_custom_call.1} parent=31 // pred_region
          %s661 = ssub.s32 16, 16
          %662 = vsyncadd %s654, %s661
          %s663 = smul.addr %s17, 16
          %s664 = scalar_lea.hbm %s3, %s663
          %s666 = sshll.u32 %s656, 4
          %s667 = int_to_ptr.vmem [resolvable:$true] %s666
          %669 = dma.vmem_to_hbm [thread:$0]  %s667, 16, %s664, %s654
        $region36: #{tpu_custom_call.1} parent=31 // pred_fallthru
          _
      $region32: #{tpu_custom_call.1} parent=5 // pred_fallthru
        _
      %p670 = scmp.le.s32.totalorder 2, %s12
      // Predicated region
      $region37: #{tpu_custom_call.1} parent=5 // pred_check
        %p671 = pneg %p670
      $region38: #{tpu_custom_call.1} parent=5 // pred_check_branch
        %673 = sbr.rel (%p671) target = $region40
      $region39: #{tpu_custom_call.1} parent=5 // pred_region
        %s674 = ssub.s32 %s12, 2
        // Predicated region
        $region41: #{tpu_custom_call.1} parent=39 // pred_check
          %p675 = pneg %p109
        $region42: #{tpu_custom_call.1} parent=39 // pred_check_branch
          %677 = sbr.rel (%p675) target = $region44
        $region43: #{tpu_custom_call.1} parent=39 // pred_region
          %s678 = sand.u32 %s94, 1
          %s679 = scalar_lea.sflag [#allocation3], %s678
          %s680 = sand.u32 %s94, 1
          %s681 = scalar_lea.vmem [#allocation2], %s680
          %682 = dma.done %s679, 16
        $region44: #{tpu_custom_call.1} parent=39 // pred_fallthru
          _
      $region40: #{tpu_custom_call.1} parent=5 // pred_fallthru
        _
    $region6: #{tpu_custom_call.1} parent=1 // loop_footer
      %s16 = sadd.s32 1, %s12
    $region7: #{tpu_custom_call.1} parent=1 // loop_footer_branch
      %11 = sbr.rel target = $region3
    $region8: #{tpu_custom_call.1} parent=1 // loop_exit
      _
    %683 = vsyncpa [#allocation3], 1
    %s684 = scalar_lea.sflag [#allocation3], 1
    %685 = vsyncpa %s684, 1

</llo_original>
